<compile_context>
chip_gen: v7x
topology: tpu7x:2x2x1
jax: 0.10.0
libtpu: 0.0.40
codegen_flags: <defaults>
</compile_context>

<pallas_src>
import math
import jax
import jax.numpy as jnp
from jax.experimental import pallas as pl
from jax.experimental.pallas import tpu as pltpu


def gru_fc_kernel(tok_ref, emb_ref, wih_ref, whh_ref,
                  bias_i_ref, bhh_n_ref, wfc_ref, bfc_ref, out_ref):
    S = tok_ref.shape[0]
    V, H = emb_ref.shape

    # ---- prologue: one-hot MXU gather of the S embedding rows (h-independent) --------
    iota = jax.lax.broadcasted_iota(jnp.int32, (S, V), 1)
    onehot = (iota == tok_ref[...]).astype(jnp.float32)                    # (S, V)
    x = jnp.dot(onehot, emb_ref[...], preferred_element_type=jnp.float32)  # (S, H) exact

    # ---- hoisted input projection: one (S,H)@(H,3H) bf16 matmul ----------------------
    gi_all = jnp.dot(x.astype(jnp.bfloat16), wih_ref[...],
                     preferred_element_type=jnp.float32) + bias_i_ref[...]  # (S, 3H)

    w_hh = whh_ref[...]          # (H, 3H) bf16 — single fused RHS for the whole loop
    bhh_n = bhh_n_ref[...]       # (1, H)  f32

    # ---- recurrence: h vreg-resident, one fused matmul per step, fully unrolled ------
    h = jnp.zeros((1, H), jnp.float32)                   # h_0 = torch.zeros(...)
    for t in range(S):
        gh = jnp.dot(h.astype(jnp.bfloat16), w_hh,
                     preferred_element_type=jnp.float32)                    # (1, 3H)
        rz = jax.nn.sigmoid(gi_all[t:t + 1, 0:2 * H] + gh[:, 0:2 * H])      # [r | z]
        r = rz[:, 0:H]
        z = rz[:, H:2 * H]
        n = jnp.tanh(gi_all[t:t + 1, 2 * H:3 * H] + r * (gh[:, 2 * H:3 * H] + bhh_n))
        h = n + z * (h - n)

    # ---- fc applied to final hidden state ---------------------------------------------
    out_ref[...] = jnp.dot(h.astype(jnp.bfloat16), wfc_ref[...],
                           preferred_element_type=jnp.float32) + bfc_ref[...]


def rnn_classifier_forward(tokens, emb_table, w_ih, w_hh, b_ih, b_hh, w_fc, b_fc):
    V, H = emb_table.shape
    O = w_fc.shape[0]
    S = tokens.shape[0]

    # Glue: transpose weights so the kernel does plain (.,H)@(H,K) matmuls; bf16 for MXU.
    w_ih_t = jnp.asarray(w_ih.T, jnp.bfloat16)                 # (H, 3H), gates [r,z,n]
    w_hh_t = jnp.asarray(w_hh.T, jnp.bfloat16)                 # (H, 3H), gates [r,z,n]
    w_fc_t = jnp.asarray(w_fc.T, jnp.bfloat16)                 # (H, O)

    b_ih_f = jnp.asarray(b_ih, jnp.float32)
    b_hh_f = jnp.asarray(b_hh, jnp.float32)
    # Fold b_hh[r], b_hh[z] into the hoisted bias; b_hh[n] must stay inside r*(...).
    bias_i = (b_ih_f + jnp.concatenate(
        [b_hh_f[0:2 * H], jnp.zeros((H,), jnp.float32)])).reshape(1, 3 * H)
    bhh_n = b_hh_f[2 * H:3 * H].reshape(1, H)
    b_fc2 = jnp.asarray(b_fc, jnp.float32).reshape(1, O)

    # Clamp token ids so the one-hot gather can never produce an all-zero row.
    tok = jnp.clip(tokens.astype(jnp.int32), 0, V - 1).reshape(S, 1)

    vmem = pl.BlockSpec(memory_space=pltpu.MemorySpace.VMEM)

    out = pl.pallas_call(
        gru_fc_kernel,
        out_shape=jax.ShapeDtypeStruct((1, O), jnp.float32),
        in_specs=[vmem] * 8,
        out_specs=vmem,
    )(tok, jnp.asarray(emb_table, jnp.float32), w_ih_t, w_hh_t,
      bias_i, bhh_n, w_fc_t, b_fc2)

    # torch returns fc(hidden) with hidden shape (n_layers=1, batch=1, H)
    return out.reshape(1, 1, O)


def ref_forward(tokens, emb_table, w_ih, w_hh, b_ih, b_hh, w_fc, b_fc):
    """Pure-JAX f32 reference of the PyTorch forward (batch=1, n_layers=1)."""
    H = emb_table.shape[1]
    emb = emb_table[tokens]                 # (S, H)
    h = jnp.zeros((1, H), jnp.float32)
    for t in range(tokens.shape[0]):
        x = emb[t:t + 1]
        gi = x @ w_ih.T + b_ih
        gh = h @ w_hh.T + b_hh
        r = jax.nn.sigmoid(gi[:, 0:H] + gh[:, 0:H])
        z = jax.nn.sigmoid(gi[:, H:2 * H] + gh[:, H:2 * H])
        n = jnp.tanh(gi[:, 2 * H:3 * H] + r * gh[:, 2 * H:3 * H])
        h = (1.0 - z) * n + z * h
    return (h @ w_fc.T + b_fc).reshape(1, 1, -1)


if __name__ == "__main__":
    V = 64        # input_size (vocab)
    H = 32        # hidden_size
    O = 8         # output_size (n classes)
    S = 8         # sequence length

    key = jax.random.PRNGKey(0)
    k_tok, k_emb, k_wih, k_whh, k_bih, k_bhh, k_wfc, k_bfc = jax.random.split(key, 8)

    tokens = jax.random.randint(k_tok, (S,), 0, V, dtype=jnp.int32)

    stdv = 1.0 / math.sqrt(H)
    emb_table = jax.random.normal(k_emb, (V, H), jnp.float32)            # Embedding ~ N(0,1)
    w_ih = jax.random.uniform(k_wih, (3 * H, H), jnp.float32, -stdv, stdv)
    w_hh = jax.random.uniform(k_whh, (3 * H, H), jnp.float32, -stdv, stdv)
    b_ih = jax.random.uniform(k_bih, (3 * H,), jnp.float32, -stdv, stdv)
    b_hh = jax.random.uniform(k_bhh, (3 * H,), jnp.float32, -stdv, stdv)
    w_fc = jax.random.uniform(k_wfc, (O, H), jnp.float32, -stdv, stdv)
    b_fc = jax.random.uniform(k_bfc, (O,), jnp.float32, -stdv, stdv)

    out = rnn_classifier_forward(tokens, emb_table, w_ih, w_hh, b_ih, b_hh, w_fc, b_fc)
    out = jax.block_until_ready(out)

    ref = ref_forward(tokens, emb_table, w_ih, w_hh, b_ih, b_hh, w_fc, b_fc)
    assert out.shape == (1, 1, O), out.shape
    # bf16 matmul operands -> loosen tolerance vs the f32 reference
    assert jnp.allclose(out, ref, atol=5e-2, rtol=5e-2), (out, ref)

    print("KERNEL_OK")
</pallas_src>

<mosaic_0001>
module attributes {stable_mosaic.version = 11 : i64} {
  func.func @gru_fc_kernel(%arg0: memref<8x1xi32, #tpu.memory_space<vmem>>, %arg1: memref<64x32xf32, #tpu.memory_space<vmem>>, %arg2: memref<32x96xbf16, #tpu.memory_space<vmem>>, %arg3: memref<32x96xbf16, #tpu.memory_space<vmem>>, %arg4: memref<1x96xf32, #tpu.memory_space<vmem>>, %arg5: memref<1x32xf32, #tpu.memory_space<vmem>>, %arg6: memref<32x8xbf16, #tpu.memory_space<vmem>>, %arg7: memref<1x8xf32, #tpu.memory_space<vmem>>, %arg8: memref<1x8xf32, #tpu.memory_space<vmem>>) attributes {dimension_semantics = [], scalar_prefetch = 0 : i64, scratch_operands = 0 : i64, tpu.core_type = #tpu.core_type<tc>} {
    %0 = tpu.iota {dimensions = array<i32: 1>} : vector<8x64xi32>
    %c0 = arith.constant 0 : index
    %c0_0 = arith.constant 0 : index
    %1 = vector.load %arg0[%c0, %c0_0] : memref<8x1xi32, #tpu.memory_space<vmem>>, vector<8x1xi32>
    %2 = vector.broadcast %1 : vector<8x1xi32> to vector<8x64xi32>
    %3 = arith.cmpi eq, %0, %2 : vector<8x64xi32>
    %4 = arith.extui %3 : vector<8x64xi1> to vector<8x64xi32>
    %5 = arith.sitofp %4 : vector<8x64xi32> to vector<8x64xf32>
    %c0_1 = arith.constant 0 : index
    %c0_2 = arith.constant 0 : index
    %6 = vector.load %arg1[%c0_1, %c0_2] : memref<64x32xf32, #tpu.memory_space<vmem>>, vector<64x32xf32>
    %cst = arith.constant dense<0.000000e+00> : vector<8x32xf32>
    %7 = tpu.matmul %5, %6, %cst {dimension_numbers = #tpu.dot_dimension_numbers<[1], [0], [0], [1], [0, 0, 1, 1], [], []>} : vector<8x64xf32>, vector<64x32xf32>, vector<8x32xf32> -> vector<8x32xf32>
    %8 = arith.truncf %7 : vector<8x32xf32> to vector<8x32xbf16>
    %c0_3 = arith.constant 0 : index
    %c0_4 = arith.constant 0 : index
    %9 = vector.load %arg2[%c0_3, %c0_4] : memref<32x96xbf16, #tpu.memory_space<vmem>>, vector<32x96xbf16>
    %cst_5 = arith.constant dense<0.000000e+00> : vector<8x96xf32>
    %10 = tpu.matmul %8, %9, %cst_5 {dimension_numbers = #tpu.dot_dimension_numbers<[1], [0], [0], [1], [0, 0, 1, 1], [], []>} : vector<8x32xbf16>, vector<32x96xbf16>, vector<8x96xf32> -> vector<8x96xf32>
    %c0_6 = arith.constant 0 : index
    %c0_7 = arith.constant 0 : index
    %11 = vector.load %arg4[%c0_6, %c0_7] : memref<1x96xf32, #tpu.memory_space<vmem>>, vector<1x96xf32>
    %12 = vector.broadcast %11 : vector<1x96xf32> to vector<8x96xf32>
    %13 = arith.addf %10, %12 : vector<8x96xf32>
    %c0_8 = arith.constant 0 : index
    %c0_9 = arith.constant 0 : index
    %14 = vector.load %arg3[%c0_8, %c0_9] : memref<32x96xbf16, #tpu.memory_space<vmem>>, vector<32x96xbf16>
    %c0_10 = arith.constant 0 : index
    %c0_11 = arith.constant 0 : index
    %15 = vector.load %arg5[%c0_10, %c0_11] : memref<1x32xf32, #tpu.memory_space<vmem>>, vector<1x32xf32>
    %cst_12 = arith.constant 0.000000e+00 : f32
    %16 = vector.broadcast %cst_12 : f32 to vector<1x32xf32>
    %17 = arith.truncf %16 : vector<1x32xf32> to vector<1x32xbf16>
    %cst_13 = arith.constant dense<0.000000e+00> : vector<1x96xf32>
    %18 = tpu.matmul %17, %14, %cst_13 {dimension_numbers = #tpu.dot_dimension_numbers<[1], [0], [0], [1], [0, 0, 1, 1], [], []>} : vector<1x32xbf16>, vector<32x96xbf16>, vector<1x96xf32> -> vector<1x96xf32>
    %19 = vector.extract_strided_slice %13 {offsets = [0, 0], sizes = [1, 64], strides = [1, 1]} : vector<8x96xf32> to vector<1x64xf32>
    %20 = vector.extract_strided_slice %18 {offsets = [0, 0], sizes = [1, 64], strides = [1, 1]} : vector<1x96xf32> to vector<1x64xf32>
    %21 = arith.addf %19, %20 : vector<1x64xf32>
    %22 = arith.negf %21 : vector<1x64xf32>
    %23 = math.exp %22 : vector<1x64xf32>
    %cst_14 = arith.constant 1.000000e+00 : f32
    %24 = vector.broadcast %cst_14 : f32 to vector<1x64xf32>
    %25 = arith.addf %24, %23 : vector<1x64xf32>
    %26 = arith.divf %24, %25 : vector<1x64xf32>
    %27 = vector.extract_strided_slice %26 {offsets = [0, 0], sizes = [1, 32], strides = [1, 1]} : vector<1x64xf32> to vector<1x32xf32>
    %28 = vector.extract_strided_slice %26 {offsets = [0, 32], sizes = [1, 32], strides = [1, 1]} : vector<1x64xf32> to vector<1x32xf32>
    %29 = vector.extract_strided_slice %13 {offsets = [0, 64], sizes = [1, 32], strides = [1, 1]} : vector<8x96xf32> to vector<1x32xf32>
    %30 = vector.extract_strided_slice %18 {offsets = [0, 64], sizes = [1, 32], strides = [1, 1]} : vector<1x96xf32> to vector<1x32xf32>
    %31 = arith.addf %30, %15 : vector<1x32xf32>
    %32 = arith.mulf %27, %31 : vector<1x32xf32>
    %33 = arith.addf %29, %32 : vector<1x32xf32>
    %34 = math.tanh %33 : vector<1x32xf32>
    %35 = arith.subf %16, %34 : vector<1x32xf32>
    %36 = arith.mulf %28, %35 : vector<1x32xf32>
    %37 = arith.addf %34, %36 : vector<1x32xf32>
    %38 = arith.truncf %37 : vector<1x32xf32> to vector<1x32xbf16>
    %cst_15 = arith.constant dense<0.000000e+00> : vector<1x96xf32>
    %39 = tpu.matmul %38, %14, %cst_15 {dimension_numbers = #tpu.dot_dimension_numbers<[1], [0], [0], [1], [0, 0, 1, 1], [], []>} : vector<1x32xbf16>, vector<32x96xbf16>, vector<1x96xf32> -> vector<1x96xf32>
    %40 = vector.extract_strided_slice %13 {offsets = [1, 0], sizes = [1, 64], strides = [1, 1]} : vector<8x96xf32> to vector<1x64xf32>
    %41 = vector.extract_strided_slice %39 {offsets = [0, 0], sizes = [1, 64], strides = [1, 1]} : vector<1x96xf32> to vector<1x64xf32>
    %42 = arith.addf %40, %41 : vector<1x64xf32>
    %43 = arith.negf %42 : vector<1x64xf32>
    %44 = math.exp %43 : vector<1x64xf32>
    %cst_16 = arith.constant 1.000000e+00 : f32
    %45 = vector.broadcast %cst_16 : f32 to vector<1x64xf32>
    %46 = arith.addf %45, %44 : vector<1x64xf32>
    %47 = arith.divf %45, %46 : vector<1x64xf32>
    %48 = vector.extract_strided_slice %47 {offsets = [0, 0], sizes = [1, 32], strides = [1, 1]} : vector<1x64xf32> to vector<1x32xf32>
    %49 = vector.extract_strided_slice %47 {offsets = [0, 32], sizes = [1, 32], strides = [1, 1]} : vector<1x64xf32> to vector<1x32xf32>
    %50 = vector.extract_strided_slice %13 {offsets = [1, 64], sizes = [1, 32], strides = [1, 1]} : vector<8x96xf32> to vector<1x32xf32>
    %51 = vector.extract_strided_slice %39 {offsets = [0, 64], sizes = [1, 32], strides = [1, 1]} : vector<1x96xf32> to vector<1x32xf32>
    %52 = arith.addf %51, %15 : vector<1x32xf32>
    %53 = arith.mulf %48, %52 : vector<1x32xf32>
    %54 = arith.addf %50, %53 : vector<1x32xf32>
    %55 = math.tanh %54 : vector<1x32xf32>
    %56 = arith.subf %37, %55 : vector<1x32xf32>
    %57 = arith.mulf %49, %56 : vector<1x32xf32>
    %58 = arith.addf %55, %57 : vector<1x32xf32>
    %59 = arith.truncf %58 : vector<1x32xf32> to vector<1x32xbf16>
    %cst_17 = arith.constant dense<0.000000e+00> : vector<1x96xf32>
    %60 = tpu.matmul %59, %14, %cst_17 {dimension_numbers = #tpu.dot_dimension_numbers<[1], [0], [0], [1], [0, 0, 1, 1], [], []>} : vector<1x32xbf16>, vector<32x96xbf16>, vector<1x96xf32> -> vector<1x96xf32>
    %61 = vector.extract_strided_slice %13 {offsets = [2, 0], sizes = [1, 64], strides = [1, 1]} : vector<8x96xf32> to vector<1x64xf32>
    %62 = vector.extract_strided_slice %60 {offsets = [0, 0], sizes = [1, 64], strides = [1, 1]} : vector<1x96xf32> to vector<1x64xf32>
    %63 = arith.addf %61, %62 : vector<1x64xf32>
    %64 = arith.negf %63 : vector<1x64xf32>
    %65 = math.exp %64 : vector<1x64xf32>
    %cst_18 = arith.constant 1.000000e+00 : f32
    %66 = vector.broadcast %cst_18 : f32 to vector<1x64xf32>
    %67 = arith.addf %66, %65 : vector<1x64xf32>
    %68 = arith.divf %66, %67 : vector<1x64xf32>
    %69 = vector.extract_strided_slice %68 {offsets = [0, 0], sizes = [1, 32], strides = [1, 1]} : vector<1x64xf32> to vector<1x32xf32>
    %70 = vector.extract_strided_slice %68 {offsets = [0, 32], sizes = [1, 32], strides = [1, 1]} : vector<1x64xf32> to vector<1x32xf32>
    %71 = vector.extract_strided_slice %13 {offsets = [2, 64], sizes = [1, 32], strides = [1, 1]} : vector<8x96xf32> to vector<1x32xf32>
    %72 = vector.extract_strided_slice %60 {offsets = [0, 64], sizes = [1, 32], strides = [1, 1]} : vector<1x96xf32> to vector<1x32xf32>
    %73 = arith.addf %72, %15 : vector<1x32xf32>
    %74 = arith.mulf %69, %73 : vector<1x32xf32>
    %75 = arith.addf %71, %74 : vector<1x32xf32>
    %76 = math.tanh %75 : vector<1x32xf32>
    %77 = arith.subf %58, %76 : vector<1x32xf32>
    %78 = arith.mulf %70, %77 : vector<1x32xf32>
    %79 = arith.addf %76, %78 : vector<1x32xf32>
    %80 = arith.truncf %79 : vector<1x32xf32> to vector<1x32xbf16>
    %cst_19 = arith.constant dense<0.000000e+00> : vector<1x96xf32>
    %81 = tpu.matmul %80, %14, %cst_19 {dimension_numbers = #tpu.dot_dimension_numbers<[1], [0], [0], [1], [0, 0, 1, 1], [], []>} : vector<1x32xbf16>, vector<32x96xbf16>, vector<1x96xf32> -> vector<1x96xf32>
    %82 = vector.extract_strided_slice %13 {offsets = [3, 0], sizes = [1, 64], strides = [1, 1]} : vector<8x96xf32> to vector<1x64xf32>
    %83 = vector.extract_strided_slice %81 {offsets = [0, 0], sizes = [1, 64], strides = [1, 1]} : vector<1x96xf32> to vector<1x64xf32>
    %84 = arith.addf %82, %83 : vector<1x64xf32>
    %85 = arith.negf %84 : vector<1x64xf32>
    %86 = math.exp %85 : vector<1x64xf32>
    %cst_20 = arith.constant 1.000000e+00 : f32
    %87 = vector.broadcast %cst_20 : f32 to vector<1x64xf32>
    %88 = arith.addf %87, %86 : vector<1x64xf32>
    %89 = arith.divf %87, %88 : vector<1x64xf32>
    %90 = vector.extract_strided_slice %89 {offsets = [0, 0], sizes = [1, 32], strides = [1, 1]} : vector<1x64xf32> to vector<1x32xf32>
    %91 = vector.extract_strided_slice %89 {offsets = [0, 32], sizes = [1, 32], strides = [1, 1]} : vector<1x64xf32> to vector<1x32xf32>
    %92 = vector.extract_strided_slice %13 {offsets = [3, 64], sizes = [1, 32], strides = [1, 1]} : vector<8x96xf32> to vector<1x32xf32>
    %93 = vector.extract_strided_slice %81 {offsets = [0, 64], sizes = [1, 32], strides = [1, 1]} : vector<1x96xf32> to vector<1x32xf32>
    %94 = arith.addf %93, %15 : vector<1x32xf32>
    %95 = arith.mulf %90, %94 : vector<1x32xf32>
    %96 = arith.addf %92, %95 : vector<1x32xf32>
    %97 = math.tanh %96 : vector<1x32xf32>
    %98 = arith.subf %79, %97 : vector<1x32xf32>
    %99 = arith.mulf %91, %98 : vector<1x32xf32>
    %100 = arith.addf %97, %99 : vector<1x32xf32>
    %101 = arith.truncf %100 : vector<1x32xf32> to vector<1x32xbf16>
    %cst_21 = arith.constant dense<0.000000e+00> : vector<1x96xf32>
    %102 = tpu.matmul %101, %14, %cst_21 {dimension_numbers = #tpu.dot_dimension_numbers<[1], [0], [0], [1], [0, 0, 1, 1], [], []>} : vector<1x32xbf16>, vector<32x96xbf16>, vector<1x96xf32> -> vector<1x96xf32>
    %103 = vector.extract_strided_slice %13 {offsets = [4, 0], sizes = [1, 64], strides = [1, 1]} : vector<8x96xf32> to vector<1x64xf32>
    %104 = vector.extract_strided_slice %102 {offsets = [0, 0], sizes = [1, 64], strides = [1, 1]} : vector<1x96xf32> to vector<1x64xf32>
    %105 = arith.addf %103, %104 : vector<1x64xf32>
    %106 = arith.negf %105 : vector<1x64xf32>
    %107 = math.exp %106 : vector<1x64xf32>
    %cst_22 = arith.constant 1.000000e+00 : f32
    %108 = vector.broadcast %cst_22 : f32 to vector<1x64xf32>
    %109 = arith.addf %108, %107 : vector<1x64xf32>
    %110 = arith.divf %108, %109 : vector<1x64xf32>
    %111 = vector.extract_strided_slice %110 {offsets = [0, 0], sizes = [1, 32], strides = [1, 1]} : vector<1x64xf32> to vector<1x32xf32>
    %112 = vector.extract_strided_slice %110 {offsets = [0, 32], sizes = [1, 32], strides = [1, 1]} : vector<1x64xf32> to vector<1x32xf32>
    %113 = vector.extract_strided_slice %13 {offsets = [4, 64], sizes = [1, 32], strides = [1, 1]} : vector<8x96xf32> to vector<1x32xf32>
    %114 = vector.extract_strided_slice %102 {offsets = [0, 64], sizes = [1, 32], strides = [1, 1]} : vector<1x96xf32> to vector<1x32xf32>
    %115 = arith.addf %114, %15 : vector<1x32xf32>
    %116 = arith.mulf %111, %115 : vector<1x32xf32>
    %117 = arith.addf %113, %116 : vector<1x32xf32>
    %118 = math.tanh %117 : vector<1x32xf32>
    %119 = arith.subf %100, %118 : vector<1x32xf32>
    %120 = arith.mulf %112, %119 : vector<1x32xf32>
    %121 = arith.addf %118, %120 : vector<1x32xf32>
    %122 = arith.truncf %121 : vector<1x32xf32> to vector<1x32xbf16>
    %cst_23 = arith.constant dense<0.000000e+00> : vector<1x96xf32>
    %123 = tpu.matmul %122, %14, %cst_23 {dimension_numbers = #tpu.dot_dimension_numbers<[1], [0], [0], [1], [0, 0, 1, 1], [], []>} : vector<1x32xbf16>, vector<32x96xbf16>, vector<1x96xf32> -> vector<1x96xf32>
    %124 = vector.extract_strided_slice %13 {offsets = [5, 0], sizes = [1, 64], strides = [1, 1]} : vector<8x96xf32> to vector<1x64xf32>
    %125 = vector.extract_strided_slice %123 {offsets = [0, 0], sizes = [1, 64], strides = [1, 1]} : vector<1x96xf32> to vector<1x64xf32>
    %126 = arith.addf %124, %125 : vector<1x64xf32>
    %127 = arith.negf %126 : vector<1x64xf32>
    %128 = math.exp %127 : vector<1x64xf32>
    %cst_24 = arith.constant 1.000000e+00 : f32
    %129 = vector.broadcast %cst_24 : f32 to vector<1x64xf32>
    %130 = arith.addf %129, %128 : vector<1x64xf32>
    %131 = arith.divf %129, %130 : vector<1x64xf32>
    %132 = vector.extract_strided_slice %131 {offsets = [0, 0], sizes = [1, 32], strides = [1, 1]} : vector<1x64xf32> to vector<1x32xf32>
    %133 = vector.extract_strided_slice %131 {offsets = [0, 32], sizes = [1, 32], strides = [1, 1]} : vector<1x64xf32> to vector<1x32xf32>
    %134 = vector.extract_strided_slice %13 {offsets = [5, 64], sizes = [1, 32], strides = [1, 1]} : vector<8x96xf32> to vector<1x32xf32>
    %135 = vector.extract_strided_slice %123 {offsets = [0, 64], sizes = [1, 32], strides = [1, 1]} : vector<1x96xf32> to vector<1x32xf32>
    %136 = arith.addf %135, %15 : vector<1x32xf32>
    %137 = arith.mulf %132, %136 : vector<1x32xf32>
    %138 = arith.addf %134, %137 : vector<1x32xf32>
    %139 = math.tanh %138 : vector<1x32xf32>
    %140 = arith.subf %121, %139 : vector<1x32xf32>
    %141 = arith.mulf %133, %140 : vector<1x32xf32>
    %142 = arith.addf %139, %141 : vector<1x32xf32>
    %143 = arith.truncf %142 : vector<1x32xf32> to vector<1x32xbf16>
    %cst_25 = arith.constant dense<0.000000e+00> : vector<1x96xf32>
    %144 = tpu.matmul %143, %14, %cst_25 {dimension_numbers = #tpu.dot_dimension_numbers<[1], [0], [0], [1], [0, 0, 1, 1], [], []>} : vector<1x32xbf16>, vector<32x96xbf16>, vector<1x96xf32> -> vector<1x96xf32>
    %145 = vector.extract_strided_slice %13 {offsets = [6, 0], sizes = [1, 64], strides = [1, 1]} : vector<8x96xf32> to vector<1x64xf32>
    %146 = vector.extract_strided_slice %144 {offsets = [0, 0], sizes = [1, 64], strides = [1, 1]} : vector<1x96xf32> to vector<1x64xf32>
    %147 = arith.addf %145, %146 : vector<1x64xf32>
    %148 = arith.negf %147 : vector<1x64xf32>
    %149 = math.exp %148 : vector<1x64xf32>
    %cst_26 = arith.constant 1.000000e+00 : f32
    %150 = vector.broadcast %cst_26 : f32 to vector<1x64xf32>
    %151 = arith.addf %150, %149 : vector<1x64xf32>
    %152 = arith.divf %150, %151 : vector<1x64xf32>
    %153 = vector.extract_strided_slice %152 {offsets = [0, 0], sizes = [1, 32], strides = [1, 1]} : vector<1x64xf32> to vector<1x32xf32>
    %154 = vector.extract_strided_slice %152 {offsets = [0, 32], sizes = [1, 32], strides = [1, 1]} : vector<1x64xf32> to vector<1x32xf32>
    %155 = vector.extract_strided_slice %13 {offsets = [6, 64], sizes = [1, 32], strides = [1, 1]} : vector<8x96xf32> to vector<1x32xf32>
    %156 = vector.extract_strided_slice %144 {offsets = [0, 64], sizes = [1, 32], strides = [1, 1]} : vector<1x96xf32> to vector<1x32xf32>
    %157 = arith.addf %156, %15 : vector<1x32xf32>
    %158 = arith.mulf %153, %157 : vector<1x32xf32>
    %159 = arith.addf %155, %158 : vector<1x32xf32>
    %160 = math.tanh %159 : vector<1x32xf32>
    %161 = arith.subf %142, %160 : vector<1x32xf32>
    %162 = arith.mulf %154, %161 : vector<1x32xf32>
    %163 = arith.addf %160, %162 : vector<1x32xf32>
    %164 = arith.truncf %163 : vector<1x32xf32> to vector<1x32xbf16>
    %cst_27 = arith.constant dense<0.000000e+00> : vector<1x96xf32>
    %165 = tpu.matmul %164, %14, %cst_27 {dimension_numbers = #tpu.dot_dimension_numbers<[1], [0], [0], [1], [0, 0, 1, 1], [], []>} : vector<1x32xbf16>, vector<32x96xbf16>, vector<1x96xf32> -> vector<1x96xf32>
    %166 = vector.extract_strided_slice %13 {offsets = [7, 0], sizes = [1, 64], strides = [1, 1]} : vector<8x96xf32> to vector<1x64xf32>
    %167 = vector.extract_strided_slice %165 {offsets = [0, 0], sizes = [1, 64], strides = [1, 1]} : vector<1x96xf32> to vector<1x64xf32>
    %168 = arith.addf %166, %167 : vector<1x64xf32>
    %169 = arith.negf %168 : vector<1x64xf32>
    %170 = math.exp %169 : vector<1x64xf32>
    %cst_28 = arith.constant 1.000000e+00 : f32
    %171 = vector.broadcast %cst_28 : f32 to vector<1x64xf32>
    %172 = arith.addf %171, %170 : vector<1x64xf32>
    %173 = arith.divf %171, %172 : vector<1x64xf32>
    %174 = vector.extract_strided_slice %173 {offsets = [0, 0], sizes = [1, 32], strides = [1, 1]} : vector<1x64xf32> to vector<1x32xf32>
    %175 = vector.extract_strided_slice %173 {offsets = [0, 32], sizes = [1, 32], strides = [1, 1]} : vector<1x64xf32> to vector<1x32xf32>
    %176 = vector.extract_strided_slice %13 {offsets = [7, 64], sizes = [1, 32], strides = [1, 1]} : vector<8x96xf32> to vector<1x32xf32>
    %177 = vector.extract_strided_slice %165 {offsets = [0, 64], sizes = [1, 32], strides = [1, 1]} : vector<1x96xf32> to vector<1x32xf32>
    %178 = arith.addf %177, %15 : vector<1x32xf32>
    %179 = arith.mulf %174, %178 : vector<1x32xf32>
    %180 = arith.addf %176, %179 : vector<1x32xf32>
    %181 = math.tanh %180 : vector<1x32xf32>
    %182 = arith.subf %163, %181 : vector<1x32xf32>
    %183 = arith.mulf %175, %182 : vector<1x32xf32>
    %184 = arith.addf %181, %183 : vector<1x32xf32>
    %185 = arith.truncf %184 : vector<1x32xf32> to vector<1x32xbf16>
    %c0_29 = arith.constant 0 : index
    %c0_30 = arith.constant 0 : index
    %186 = vector.load %arg6[%c0_29, %c0_30] : memref<32x8xbf16, #tpu.memory_space<vmem>>, vector<32x8xbf16>
    %cst_31 = arith.constant dense<0.000000e+00> : vector<1x8xf32>
    %187 = tpu.matmul %185, %186, %cst_31 {dimension_numbers = #tpu.dot_dimension_numbers<[1], [0], [0], [1], [0, 0, 1, 1], [], []>} : vector<1x32xbf16>, vector<32x8xbf16>, vector<1x8xf32> -> vector<1x8xf32>
    %c0_32 = arith.constant 0 : index
    %c0_33 = arith.constant 0 : index
    %188 = vector.load %arg7[%c0_32, %c0_33] : memref<1x8xf32, #tpu.memory_space<vmem>>, vector<1x8xf32>
    %189 = arith.addf %187, %188 : vector<1x8xf32>
    %c0_34 = arith.constant 0 : index
    %c0_35 = arith.constant 0 : index
    %190 = vector.load %arg8[%c0_34, %c0_35] : memref<1x8xf32, #tpu.memory_space<vmem>>, vector<1x8xf32>
    tpu.vector_store %arg8[%c0_34, %c0_35], %189 {strides = array<i32>} : memref<1x8xf32, #tpu.memory_space<vmem>>, vector<1x8xf32>,
    return
  }
}

</mosaic_0001>

<llo_original>
// kernel: tpu_custom_call.1
$region0: #{tpu_custom_call.1}
  #allocation0 [shape = 'u32[]', space=smem, size = 0x4, offset = 0x4, fixed_abs, tag = 'smem constant byte address 0x4 - core index']
  #allocation1 [shape = 'u32[144,128]{1,0:T(1,128)}', space=vmem, size = 0x12000, scoped, tag = 'internal scratch']
  %s0 = inlined_call_operand.vmem [shape: s32[8,1], index: 0, kind: input, shape index: {}]
  %s1 = inlined_call_operand.vmem [shape: f32[64,32], index: 1, kind: input, shape index: {}]
  %s2 = inlined_call_operand.vmem [shape: bf16[32,96], index: 2, kind: input, shape index: {}]
  %s3 = inlined_call_operand.vmem [shape: bf16[32,96], index: 3, kind: input, shape index: {}]
  %s4 = inlined_call_operand.vmem [shape: f32[1,96], index: 4, kind: input, shape index: {}]
  %s5 = inlined_call_operand.vmem [shape: f32[1,32], index: 5, kind: input, shape index: {}]
  %s6 = inlined_call_operand.vmem [shape: bf16[32,8], index: 6, kind: input, shape index: {}]
  %s7 = inlined_call_operand.vmem [shape: f32[1,8], index: 7, kind: input, shape index: {}]
  %s8 = inlined_call_operand.hbm [shape: f32[1,8], index: 8, kind: output, shape index: {}]
  %s9 = sld [smem:[#allocation0]]
  $region42: #{tpu_custom_call.1} parent=0
    _
  %s11 = ssub.s32 1, %s9
  %s12 = scalar_select 0, %s11, %s9
  $region1: #{tpu_custom_call.1} parent=0
    #allocation2 [shape = 'u8[512]{0}', space=vmem, size = 0x400, scoped, tag = 'output window, operand 0, single buffered']
    #allocation3 [shape = 's32[1]{0}', space=sflag, size = 0x4, scoped, tag = 'scoped memory for tpu_custom_call.1']
    %13 = vsyncpa [#allocation3], 0
    // Predicated region
    $region2: #{tpu_custom_call.1} parent=1 // pred_check
      _
    $region3: #{tpu_custom_call.1} parent=1 // pred_check_branch
      %15 = sbr.rel (0) target = $region5
    $region4: #{tpu_custom_call.1} parent=1 // pred_region
      _
    $region5: #{tpu_custom_call.1} parent=1 // pred_fallthru
      _
    // Predicated region
    $region6: #{tpu_custom_call.1} parent=1 // pred_check
      _
    $region7: #{tpu_custom_call.1} parent=1 // pred_check_branch
      %17 = sbr.rel (0) target = $region9
    $region8: #{tpu_custom_call.1} parent=1 // pred_region
      _
    $region9: #{tpu_custom_call.1} parent=1 // pred_fallthru
      _
    // Predicated region
    $region10: #{tpu_custom_call.1} parent=1 // pred_check
      _
    $region11: #{tpu_custom_call.1} parent=1 // pred_check_branch
      %19 = sbr.rel (0) target = $region13
    $region12: #{tpu_custom_call.1} parent=1 // pred_region
      _
    $region13: #{tpu_custom_call.1} parent=1 // pred_fallthru
      _
    // Predicated region
    $region14: #{tpu_custom_call.1} parent=1 // pred_check
      _
    $region15: #{tpu_custom_call.1} parent=1 // pred_check_branch
      %21 = sbr.rel (0) target = $region17
    $region16: #{tpu_custom_call.1} parent=1 // pred_region
      _
    $region17: #{tpu_custom_call.1} parent=1 // pred_fallthru
      _
    // Predicated region
    $region18: #{tpu_custom_call.1} parent=1 // pred_check
      _
    $region19: #{tpu_custom_call.1} parent=1 // pred_check_branch
      %23 = sbr.rel (0) target = $region21
    $region20: #{tpu_custom_call.1} parent=1 // pred_region
      _
    $region21: #{tpu_custom_call.1} parent=1 // pred_fallthru
      _
    // Predicated region
    $region22: #{tpu_custom_call.1} parent=1 // pred_check
      _
    $region23: #{tpu_custom_call.1} parent=1 // pred_check_branch
      %25 = sbr.rel (0) target = $region25
    $region24: #{tpu_custom_call.1} parent=1 // pred_region
      _
    $region25: #{tpu_custom_call.1} parent=1 // pred_fallthru
      _
    // Predicated region
    $region26: #{tpu_custom_call.1} parent=1 // pred_check
      _
    $region27: #{tpu_custom_call.1} parent=1 // pred_check_branch
      %27 = sbr.rel (0) target = $region29
    $region28: #{tpu_custom_call.1} parent=1 // pred_region
      _
    $region29: #{tpu_custom_call.1} parent=1 // pred_fallthru
      _
    // Predicated region
    $region30: #{tpu_custom_call.1} parent=1 // pred_check
      _
    $region31: #{tpu_custom_call.1} parent=1 // pred_check_branch
      %29 = sbr.rel (0) target = $region33
    $region32: #{tpu_custom_call.1} parent=1 // pred_region
      _
    $region33: #{tpu_custom_call.1} parent=1 // pred_fallthru
      _
    %v31 = vlaneseq
    %v32 = vand.u32 %v31, 127
    %v33 = vld [vmem:[%s0] sm:$0xff]
    %34 = vset.pattern.permute.xlu0 0
    %35 = vperm.xlu0 %34, %v33
    %v36 = vpop.permute.xlu0 %35
    %vm37 = vcmp.eq.s32.totalorder %v32, %v36
    %v38 = vsel %vm37, 1, 0
    %v39 = vcvt.s32.f32 %v38
    %v40 = vld [vmem:[%s1] sm:$0xff]
    %v41 = vld [vmem:[%s1 + $0x8] sm:$0xff]
    %v42 = vld [vmem:[%s1 + $0x10] sm:$0xff]
    %v43 = vld [vmem:[%s1 + $0x18] sm:$0xff]
    %v44 = vld [vmem:[%s1 + $0x20] sm:$0xff]
    %v45 = vld [vmem:[%s1 + $0x28] sm:$0xff]
    %v46 = vld [vmem:[%s1 + $0x30] sm:$0xff]
    %v47 = vld [vmem:[%s1 + $0x38] sm:$0xff]
    %vm48 = vcmask 523264
    %v50 = vsel %vm48, %v39, 0
    %52 = vmatprep.subr.mxu0 0.0
    %53 = vmatpush1.msra.mxu0 %v40
    %54 = vmatprep.subr.mxu0 0.0
    %55 = vmatpush1.msra.mxu0 %v41
    %56 = vmatprep.subr.mxu0 0.0
    %57 = vmatpush1.msra.mxu0 %v42
    %58 = vmatprep.subr.mxu0 0.0
    %59 = vmatpush1.msra.mxu0 %v43
    %60 = vmatprep.subr.mxu0 0.0
    %61 = vmatpush1.msra.mxu0 %v44
    %62 = vmatprep.subr.mxu0 0.0
    %63 = vmatpush1.msra.mxu0 %v45
    %64 = vmatprep.subr.mxu0 0.0
    %65 = vmatpush1.msra.mxu0 %v46
    %66 = vmatprep.subr.mxu0 0.0
    %67 = vmatpush1.msra.mxu0 %v47
    %68 = vmatprep.subr.mxu0 0.0
    %69 = vmatpush1.msra.mxu0 0.0
    %70 = vmatprep.subr.mxu0 0.0
    %71 = vmatpush1.msra.mxu0 0.0
    %72 = vmatprep.subr.mxu0 0.0
    %73 = vmatpush1.msra.mxu0 0.0
    %74 = vmatprep.subr.mxu0 0.0
    %75 = vmatpush1.msra.mxu0 0.0
    %76 = vmatprep.subr.mxu0 0.0
    %77 = vmatpush1.msra.mxu0 0.0
    %78 = vmatprep.subr.mxu0 0.0
    %79 = vmatpush1.msra.mxu0 0.0
    %80 = vmatprep.subr.mxu0 0.0
    %81 = vmatpush1.msra.mxu0 0.0
    %82 = vmatprep.subr.mxu0 0.0
    %83 = vmatpush1.msra.mxu0 0.0
    %84 = vmatprep.subr.mxu0 0.0
    %85 = vmatpush1.msra.mxu0 0.0
    %86 = vmatprep.subr.mxu0 0.0
    %87 = vmatpush1.msra.mxu0 0.0
    %88 = vmatprep.subr.mxu0 0.0
    %89 = vmatpush1.msra.mxu0 0.0
    %90 = vmatprep.subr.mxu0 0.0
    %91 = vmatpush1.msra.mxu0 0.0
    %92 = vmatprep.subr.mxu0 0.0
    %93 = vmatpush1.msra.mxu0 0.0
    %94 = vmatprep.subr.mxu0 0.0
    %95 = vmatpush1.msra.mxu0 0.0
    %96 = vmatprep.subr.mxu0 0.0
    %97 = vmatpush1.msra.mxu0 0.0
    %98 = vmatprep.subr.mxu0 0.0
    %99 = vmatpush1.msra.mxu0 0.0
    %100 = vmatprep.subr.mxu0 0.0
    %101 = vmatpush1.msra.mxu0 0.0
    %102 = vmatprep.subr.mxu0 0.0
    %103 = vmatpush1.msra.mxu0 0.0
    %104 = vmatprep.subr.mxu0 0.0
    %105 = vmatpush1.msra.mxu0 0.0
    %106 = vmatprep.subr.mxu0 0.0
    %107 = vmatpush1.msra.mxu0 0.0
    %108 = vmatprep.subr.mxu0 0.0
    %109 = vmatpush1.msra.mxu0 0.0
    %110 = vmatprep.subr.mxu0 0.0
    %111 = vmatpush1.msra.mxu0 0.0
    %112 = vmatprep.subr.mxu0 0.0
    %113 = vmatpush1.msra.mxu0 0.0
    %114 = vmatprep.subr.mxu0 0.0
    %115 = vmatpush1.msra.mxu0 0.0
    %116 = vmatprep.mubr.f32.mxu0 0.0
    %117 = vmatmul.mubr.f32.gmra.mrb[0].mxu0 %v50
    %v118 = vpop.f32.mrb[0].mxu0
    %v119 = vadd.f32 0.0, %v118
    %v120 = vpop.f32.mrb[0].mxu0
    %121 = vdwg.mxu0
    %v122 = vpack.c.bf16 %v119, %v119
    %v123 = vld [vmem:[%s2] sm:$0xf]
    %v124 = vld [vmem:[%s2 + $0x4] sm:$0xf]
    %v125 = vld [vmem:[%s2 + $0x8] sm:$0xf]
    %v126 = vld [vmem:[%s2 + $0xc] sm:$0xf]
    %v127 = vld [vmem:[%s4] sm:$0x1]
    %v129 = vlaneseq
    %v130 = vshrl.u32 %v129, 7
    %v131 = vsub.s32 0, %v130
    %v132 = vrot.slane %v127, %v131
    %v138 = vunpack.c.l.b16 %v123
    %v139 = vunpack.c.l.b16 %v124
    %v140 = vunpack.c.l.b16 %v125
    %v141 = vunpack.c.l.b16 %v126
    %v142 = vpack.c.b16 %v139, %v138
    %v143 = vpack.c.b16 %v141, %v140
    %vm146 = vcmask 261120
    %v148 = vsel %vm146, %v122, 0
    %150 = vmatprep.subr.bf16.mxu0 0
    %151 = vmatpush1.bf16.msra.mxu0 %v142
    %152 = vmatprep.subr.bf16.mxu0 0
    %153 = vmatpush1.bf16.msra.mxu0 %v143
    %154 = vmatprep.subr.bf16.mxu0 0
    %155 = vmatpush1.bf16.msra.mxu0 0
    %156 = vmatprep.subr.bf16.mxu0 0
    %157 = vmatpush1.bf16.msra.mxu0 0
    %158 = vmatprep.subr.bf16.mxu0 0
    %159 = vmatpush1.bf16.msra.mxu0 0
    %160 = vmatprep.subr.bf16.mxu0 0
    %161 = vmatpush1.bf16.msra.mxu0 0
    %162 = vmatprep.subr.bf16.mxu0 0
    %163 = vmatpush1.bf16.msra.mxu0 0
    %164 = vmatprep.subr.bf16.mxu0 0
    %165 = vmatpush1.bf16.msra.mxu0 0
    %166 = vmatprep.subr.bf16.mxu0 0
    %167 = vmatpush1.bf16.msra.mxu0 0
    %168 = vmatprep.subr.bf16.mxu0 0
    %169 = vmatpush1.bf16.msra.mxu0 0
    %170 = vmatprep.subr.bf16.mxu0 0
    %171 = vmatpush1.bf16.msra.mxu0 0
    %172 = vmatprep.subr.bf16.mxu0 0
    %173 = vmatpush1.bf16.msra.mxu0 0
    %174 = vmatprep.subr.bf16.mxu0 0
    %175 = vmatpush1.bf16.msra.mxu0 0
    %176 = vmatprep.subr.bf16.mxu0 0
    %177 = vmatpush1.bf16.msra.mxu0 0
    %178 = vmatprep.subr.bf16.mxu0 0
    %179 = vmatpush1.bf16.msra.mxu0 0
    %180 = vmatprep.subr.bf16.mxu0 0
    %181 = vmatpush1.bf16.msra.mxu0 0
    %182 = vmatprep.mubr.bf16.mxu0 0
    %183 = vmatmul.mubr.bf16.gmra.mrb[0].mxu0 %v148
    %v184 = vpop.f32.mrb[0].mxu0
    %v185 = vadd.f32 %v132, %v184
    %v186 = vpop.f32.mrb[0].mxu0
    %v187 = vpop.f32.mrb[0].mxu0
    %v188 = vpop.f32.mrb[0].mxu0
    %189 = vdwg.mxu0
    %v190 = vld [vmem:[%s3] sm:$0xf]
    %v191 = vld [vmem:[%s3 + $0x4] sm:$0xf]
    %v192 = vld [vmem:[%s3 + $0x8] sm:$0xf]
    %v193 = vld [vmem:[%s3 + $0xc] sm:$0xf]
    %v194 = vld [vmem:[%s5] sm:$0x1]
    %v199 = vunpack.c.l.b16 %v190
    %v200 = vunpack.c.l.b16 %v191
    %v201 = vunpack.c.l.b16 %v192
    %v202 = vunpack.c.l.b16 %v193
    %v203 = vpack.c.b16 %v200, %v199
    %v204 = vpack.c.b16 %v202, %v201
    %v208 = vsel %vm146, 0, 0
    %210 = vmatprep.subr.bf16.mxu0 0
    %211 = vmatpush1.bf16.msra.mxu0 %v203
    %212 = vmatprep.subr.bf16.mxu0 0
    %213 = vmatpush1.bf16.msra.mxu0 %v204
    %214 = vmatprep.subr.bf16.mxu0 0
    %215 = vmatpush1.bf16.msra.mxu0 0
    %216 = vmatprep.subr.bf16.mxu0 0
    %217 = vmatpush1.bf16.msra.mxu0 0
    %218 = vmatprep.subr.bf16.mxu0 0
    %219 = vmatpush1.bf16.msra.mxu0 0
    %220 = vmatprep.subr.bf16.mxu0 0
    %221 = vmatpush1.bf16.msra.mxu0 0
    %222 = vmatprep.subr.bf16.mxu0 0
    %223 = vmatpush1.bf16.msra.mxu0 0
    %224 = vmatprep.subr.bf16.mxu0 0
    %225 = vmatpush1.bf16.msra.mxu0 0
    %226 = vmatprep.subr.bf16.mxu0 0
    %227 = vmatpush1.bf16.msra.mxu0 0
    %228 = vmatprep.subr.bf16.mxu0 0
    %229 = vmatpush1.bf16.msra.mxu0 0
    %230 = vmatprep.subr.bf16.mxu0 0
    %231 = vmatpush1.bf16.msra.mxu0 0
    %232 = vmatprep.subr.bf16.mxu0 0
    %233 = vmatpush1.bf16.msra.mxu0 0
    %234 = vmatprep.subr.bf16.mxu0 0
    %235 = vmatpush1.bf16.msra.mxu0 0
    %236 = vmatprep.subr.bf16.mxu0 0
    %237 = vmatpush1.bf16.msra.mxu0 0
    %238 = vmatprep.subr.bf16.mxu0 0
    %239 = vmatpush1.bf16.msra.mxu0 0
    %240 = vmatprep.subr.bf16.mxu0 0
    %241 = vmatpush1.bf16.msra.mxu0 0
    %242 = vmatprep.mubr.bf16.mxu0 0
    %243 = vmatmul.mubr.bf16.gmra.mrb[0].mxu0 %v208
    %v244 = vpop.f32.mrb[0].mxu0
    %v245 = vadd.f32 0.0, %v244
    %v246 = vpop.f32.mrb[0].mxu0
    %v247 = vpop.f32.mrb[0].mxu0
    %v248 = vpop.f32.mrb[0].mxu0
    %249 = vdwg.mxu0
    %v250 = vadd.f32 %v185, %v245
    %v251 = vxor.u32 %v250, 2147483648
    %v252 = vmul.f32 %v251, 1.442695
    %v253 = vpow.pop %v252
    %v254 = vadd.f32 %v253, 1.0
    %v255 = vrcp.pop %v254
    %v256 = vmul.f32 1.0, %v255
    %v258 = vlaneseq
    %v259 = vshrl.u32 %v258, 7
    %v260 = vsub.s32 0, %v259
    %v261 = vrot.slane %v194, %v260
    %262 = vrot.lane.b32.xlu0 %v261, 64
    %v263 = vpop.permute.xlu0 %262
    %v265 = vadd.f32 %v245, %v263
    %267 = vrot.lane.b32.xlu0 %v265, 64
    %v268 = vpop.permute.xlu0 %267
    %v270 = vmul.f32 %v256, %v268
    %272 = vrot.lane.b32.xlu0 %v270, 64
    %v273 = vpop.permute.xlu0 %272
    %v275 = vadd.f32 %v185, %v273
    %v276 = vtanh.pop %v275
    %v277 = vsub.f32 0.0, %v276
    %279 = vrot.lane.b32.xlu0 %v277, 96
    %v280 = vpop.permute.xlu0 %279
    %v282 = vmul.f32 %v256, %v280
    %284 = vrot.lane.b32.xlu0 %v282, 32
    %v285 = vpop.permute.xlu0 %284
    %v287 = vadd.f32 %v276, %v285
    %v288 = vpack.c.bf16 %v287, %v287
    %290 = vrot.lane.b32.xlu0 %v288, 64
    %v291 = vpop.permute.xlu0 %290
    %v293 = vsel %vm146, %v291, 0
    %295 = vmatprep.subr.bf16.mxu0 0
    %296 = vmatpush1.bf16.msra.mxu0 %v203
    %297 = vmatprep.subr.bf16.mxu0 0
    %298 = vmatpush1.bf16.msra.mxu0 %v204
    %299 = vmatprep.subr.bf16.mxu0 0
    %300 = vmatpush1.bf16.msra.mxu0 0
    %301 = vmatprep.subr.bf16.mxu0 0
    %302 = vmatpush1.bf16.msra.mxu0 0
    %303 = vmatprep.subr.bf16.mxu0 0
    %304 = vmatpush1.bf16.msra.mxu0 0
    %305 = vmatprep.subr.bf16.mxu0 0
    %306 = vmatpush1.bf16.msra.mxu0 0
    %307 = vmatprep.subr.bf16.mxu0 0
    %308 = vmatpush1.bf16.msra.mxu0 0
    %309 = vmatprep.subr.bf16.mxu0 0
    %310 = vmatpush1.bf16.msra.mxu0 0
    %311 = vmatprep.subr.bf16.mxu0 0
    %312 = vmatpush1.bf16.msra.mxu0 0
    %313 = vmatprep.subr.bf16.mxu0 0
    %314 = vmatpush1.bf16.msra.mxu0 0
    %315 = vmatprep.subr.bf16.mxu0 0
    %316 = vmatpush1.bf16.msra.mxu0 0
    %317 = vmatprep.subr.bf16.mxu0 0
    %318 = vmatpush1.bf16.msra.mxu0 0
    %319 = vmatprep.subr.bf16.mxu0 0
    %320 = vmatpush1.bf16.msra.mxu0 0
    %321 = vmatprep.subr.bf16.mxu0 0
    %322 = vmatpush1.bf16.msra.mxu0 0
    %323 = vmatprep.subr.bf16.mxu0 0
    %324 = vmatpush1.bf16.msra.mxu0 0
    %325 = vmatprep.subr.bf16.mxu0 0
    %326 = vmatpush1.bf16.msra.mxu0 0
    %327 = vmatprep.mubr.bf16.mxu0 0
    %328 = vmatmul.mubr.bf16.gmra.mrb[0].mxu0 %v293
    %v329 = vpop.f32.mrb[0].mxu0
    %v330 = vadd.f32 0.0, %v329
    %v331 = vpop.f32.mrb[0].mxu0
    %v332 = vpop.f32.mrb[0].mxu0
    %v333 = vpop.f32.mrb[0].mxu0
    %334 = vdwg.mxu0
    %v336 = vrot.slane %v330, 7
    %v338 = vadd.f32 %v185, %v336
    %v339 = vxor.u32 %v338, 2147483648
    %v340 = vmul.f32 %v339, 1.442695
    %v341 = vpow.pop %v340
    %v342 = vadd.f32 %v341, 1.0
    %v343 = vrcp.pop %v342
    %v344 = vmul.f32 1.0, %v343
    %v345 = vadd.f32 %v330, %v263
    %v347 = vrot.slane %v345, 7
    %348 = vrot.lane.b32.xlu0 %v347, 64
    %v349 = vpop.permute.xlu0 %348
    %v351 = vmul.f32 %v344, %v349
    %353 = vrot.lane.b32.xlu0 %v351, 64
    %v354 = vpop.permute.xlu0 %353
    %v356 = vadd.f32 %v185, %v354
    %v357 = vtanh.pop %v356
    %v359 = vrot.slane %v357, 1
    %v361 = vsub.f32 %v287, %v359
    %v363 = vrot.slane %v361, 7
    %364 = vrot.lane.b32.xlu0 %v363, 96
    %v365 = vpop.permute.xlu0 %364
    %v367 = vmul.f32 %v344, %v365
    %369 = vrot.lane.b32.xlu0 %v367, 32
    %v370 = vpop.permute.xlu0 %369
    %v372 = vadd.f32 %v357, %v370
    %v373 = vpack.c.bf16 %v372, %v372
    %v375 = vshrl.u32 %v373, 16
    %377 = vrot.lane.b32.xlu0 %v375, 64
    %v378 = vpop.permute.xlu0 %377
    %v380 = vsel %vm146, %v378, 0
    %382 = vmatprep.subr.bf16.mxu0 0
    %383 = vmatpush1.bf16.msra.mxu0 %v203
    %384 = vmatprep.subr.bf16.mxu0 0
    %385 = vmatpush1.bf16.msra.mxu0 %v204
    %386 = vmatprep.subr.bf16.mxu0 0
    %387 = vmatpush1.bf16.msra.mxu0 0
    %388 = vmatprep.subr.bf16.mxu0 0
    %389 = vmatpush1.bf16.msra.mxu0 0
    %390 = vmatprep.subr.bf16.mxu0 0
    %391 = vmatpush1.bf16.msra.mxu0 0
    %392 = vmatprep.subr.bf16.mxu0 0
    %393 = vmatpush1.bf16.msra.mxu0 0
    %394 = vmatprep.subr.bf16.mxu0 0
    %395 = vmatpush1.bf16.msra.mxu0 0
    %396 = vmatprep.subr.bf16.mxu0 0
    %397 = vmatpush1.bf16.msra.mxu0 0
    %398 = vmatprep.subr.bf16.mxu0 0
    %399 = vmatpush1.bf16.msra.mxu0 0
    %400 = vmatprep.subr.bf16.mxu0 0
    %401 = vmatpush1.bf16.msra.mxu0 0
    %402 = vmatprep.subr.bf16.mxu0 0
    %403 = vmatpush1.bf16.msra.mxu0 0
    %404 = vmatprep.subr.bf16.mxu0 0
    %405 = vmatpush1.bf16.msra.mxu0 0
    %406 = vmatprep.subr.bf16.mxu0 0
    %407 = vmatpush1.bf16.msra.mxu0 0
    %408 = vmatprep.subr.bf16.mxu0 0
    %409 = vmatpush1.bf16.msra.mxu0 0
    %410 = vmatprep.subr.bf16.mxu0 0
    %411 = vmatpush1.bf16.msra.mxu0 0
    %412 = vmatprep.subr.bf16.mxu0 0
    %413 = vmatpush1.bf16.msra.mxu0 0
    %414 = vmatprep.mubr.bf16.mxu0 0
    %415 = vmatmul.mubr.bf16.gmra.mrb[0].mxu0 %v380
    %v416 = vpop.f32.mrb[0].mxu0
    %v417 = vadd.f32 0.0, %v416
    %v418 = vpop.f32.mrb[0].mxu0
    %v419 = vpop.f32.mrb[0].mxu0
    %v420 = vpop.f32.mrb[0].mxu0
    %421 = vdwg.mxu0
    %v423 = vrot.slane %v417, 6
    %v425 = vadd.f32 %v185, %v423
    %v426 = vxor.u32 %v425, 2147483648
    %v427 = vmul.f32 %v426, 1.442695
    %v428 = vpow.pop %v427
    %v429 = vadd.f32 %v428, 1.0
    %v430 = vrcp.pop %v429
    %v431 = vmul.f32 1.0, %v430
    %v432 = vadd.f32 %v417, %v263
    %v434 = vrot.slane %v432, 6
    %435 = vrot.lane.b32.xlu0 %v434, 64
    %v436 = vpop.permute.xlu0 %435
    %v438 = vmul.f32 %v431, %v436
    %440 = vrot.lane.b32.xlu0 %v438, 64
    %v441 = vpop.permute.xlu0 %440
    %v443 = vadd.f32 %v185, %v441
    %v444 = vtanh.pop %v443
    %v446 = vrot.slane %v444, 1
    %v448 = vsub.f32 %v372, %v446
    %v450 = vrot.slane %v448, 7
    %451 = vrot.lane.b32.xlu0 %v450, 96
    %v452 = vpop.permute.xlu0 %451
    %v454 = vmul.f32 %v431, %v452
    %456 = vrot.lane.b32.xlu0 %v454, 32
    %v457 = vpop.permute.xlu0 %456
    %v459 = vadd.f32 %v444, %v457
    %v460 = vpack.c.bf16 %v459, %v459
    %v462 = vrot.slane %v460, 1
    %463 = vrot.lane.b32.xlu0 %v462, 64
    %v464 = vpop.permute.xlu0 %463
    %v466 = vsel %vm146, %v464, 0
    %468 = vmatprep.subr.bf16.mxu0 0
    %469 = vmatpush1.bf16.msra.mxu0 %v203
    %470 = vmatprep.subr.bf16.mxu0 0
    %471 = vmatpush1.bf16.msra.mxu0 %v204
    %472 = vmatprep.subr.bf16.mxu0 0
    %473 = vmatpush1.bf16.msra.mxu0 0
    %474 = vmatprep.subr.bf16.mxu0 0
    %475 = vmatpush1.bf16.msra.mxu0 0
    %476 = vmatprep.subr.bf16.mxu0 0
    %477 = vmatpush1.bf16.msra.mxu0 0
    %478 = vmatprep.subr.bf16.mxu0 0
    %479 = vmatpush1.bf16.msra.mxu0 0
    %480 = vmatprep.subr.bf16.mxu0 0
    %481 = vmatpush1.bf16.msra.mxu0 0
    %482 = vmatprep.subr.bf16.mxu0 0
    %483 = vmatpush1.bf16.msra.mxu0 0
    %484 = vmatprep.subr.bf16.mxu0 0
    %485 = vmatpush1.bf16.msra.mxu0 0
    %486 = vmatprep.subr.bf16.mxu0 0
    %487 = vmatpush1.bf16.msra.mxu0 0
    %488 = vmatprep.subr.bf16.mxu0 0
    %489 = vmatpush1.bf16.msra.mxu0 0
    %490 = vmatprep.subr.bf16.mxu0 0
    %491 = vmatpush1.bf16.msra.mxu0 0
    %492 = vmatprep.subr.bf16.mxu0 0
    %493 = vmatpush1.bf16.msra.mxu0 0
    %494 = vmatprep.subr.bf16.mxu0 0
    %495 = vmatpush1.bf16.msra.mxu0 0
    %496 = vmatprep.subr.bf16.mxu0 0
    %497 = vmatpush1.bf16.msra.mxu0 0
    %498 = vmatprep.subr.bf16.mxu0 0
    %499 = vmatpush1.bf16.msra.mxu0 0
    %500 = vmatprep.mubr.bf16.mxu0 0
    %501 = vmatmul.mubr.bf16.gmra.mrb[0].mxu0 %v466
    %v502 = vpop.f32.mrb[0].mxu0
    %v503 = vadd.f32 0.0, %v502
    %v504 = vpop.f32.mrb[0].mxu0
    %v505 = vpop.f32.mrb[0].mxu0
    %v506 = vpop.f32.mrb[0].mxu0
    %507 = vdwg.mxu0
    %v509 = vrot.slane %v503, 5
    %v511 = vadd.f32 %v185, %v509
    %v512 = vxor.u32 %v511, 2147483648
    %v513 = vmul.f32 %v512, 1.442695
    %v514 = vpow.pop %v513
    %v515 = vadd.f32 %v514, 1.0
    %v516 = vrcp.pop %v515
    %v517 = vmul.f32 1.0, %v516
    %v518 = vadd.f32 %v503, %v263
    %v520 = vrot.slane %v518, 5
    %521 = vrot.lane.b32.xlu0 %v520, 64
    %v522 = vpop.permute.xlu0 %521
    %v524 = vmul.f32 %v517, %v522
    %526 = vrot.lane.b32.xlu0 %v524, 64
    %v527 = vpop.permute.xlu0 %526
    %v529 = vadd.f32 %v185, %v527
    %v530 = vtanh.pop %v529
    %v532 = vrot.slane %v530, 1
    %v534 = vsub.f32 %v459, %v532
    %v536 = vrot.slane %v534, 7
    %537 = vrot.lane.b32.xlu0 %v536, 96
    %v538 = vpop.permute.xlu0 %537
    %v540 = vmul.f32 %v517, %v538
    %542 = vrot.lane.b32.xlu0 %v540, 32
    %v543 = vpop.permute.xlu0 %542
    %v545 = vadd.f32 %v530, %v543
    %v546 = vpack.c.bf16 %v545, %v545
    %v548 = vshrl.u32 %v546, 16
    %v550 = vrot.slane %v548, 1
    %551 = vrot.lane.b32.xlu0 %v550, 64
    %v552 = vpop.permute.xlu0 %551
    %v554 = vsel %vm146, %v552, 0
    %556 = vmatprep.subr.bf16.mxu0 0
    %557 = vmatpush1.bf16.msra.mxu0 %v203
    %558 = vmatprep.subr.bf16.mxu0 0
    %559 = vmatpush1.bf16.msra.mxu0 %v204
    %560 = vmatprep.subr.bf16.mxu0 0
    %561 = vmatpush1.bf16.msra.mxu0 0
    %562 = vmatprep.subr.bf16.mxu0 0
    %563 = vmatpush1.bf16.msra.mxu0 0
    %564 = vmatprep.subr.bf16.mxu0 0
    %565 = vmatpush1.bf16.msra.mxu0 0
    %566 = vmatprep.subr.bf16.mxu0 0
    %567 = vmatpush1.bf16.msra.mxu0 0
    %568 = vmatprep.subr.bf16.mxu0 0
    %569 = vmatpush1.bf16.msra.mxu0 0
    %570 = vmatprep.subr.bf16.mxu0 0
    %571 = vmatpush1.bf16.msra.mxu0 0
    %572 = vmatprep.subr.bf16.mxu0 0
    %573 = vmatpush1.bf16.msra.mxu0 0
    %574 = vmatprep.subr.bf16.mxu0 0
    %575 = vmatpush1.bf16.msra.mxu0 0
    %576 = vmatprep.subr.bf16.mxu0 0
    %577 = vmatpush1.bf16.msra.mxu0 0
    %578 = vmatprep.subr.bf16.mxu0 0
    %579 = vmatpush1.bf16.msra.mxu0 0
    %580 = vmatprep.subr.bf16.mxu0 0
    %581 = vmatpush1.bf16.msra.mxu0 0
    %582 = vmatprep.subr.bf16.mxu0 0
    %583 = vmatpush1.bf16.msra.mxu0 0
    %584 = vmatprep.subr.bf16.mxu0 0
    %585 = vmatpush1.bf16.msra.mxu0 0
    %586 = vmatprep.subr.bf16.mxu0 0
    %587 = vmatpush1.bf16.msra.mxu0 0
    %588 = vmatprep.mubr.bf16.mxu0 0
    %589 = vmatmul.mubr.bf16.gmra.mrb[0].mxu0 %v554
    %v590 = vpop.f32.mrb[0].mxu0
    %v591 = vadd.f32 0.0, %v590
    %v592 = vpop.f32.mrb[0].mxu0
    %v593 = vpop.f32.mrb[0].mxu0
    %v594 = vpop.f32.mrb[0].mxu0
    %595 = vdwg.mxu0
    %v597 = vrot.slane %v591, 4
    %v599 = vadd.f32 %v185, %v597
    %v600 = vxor.u32 %v599, 2147483648
    %v601 = vmul.f32 %v600, 1.442695
    %v602 = vpow.pop %v601
    %v603 = vadd.f32 %v602, 1.0
    %v604 = vrcp.pop %v603
    %v605 = vmul.f32 1.0, %v604
    %v606 = vadd.f32 %v591, %v263
    %v608 = vrot.slane %v606, 4
    %609 = vrot.lane.b32.xlu0 %v608, 64
    %v610 = vpop.permute.xlu0 %609
    %v612 = vmul.f32 %v605, %v610
    %614 = vrot.lane.b32.xlu0 %v612, 64
    %v615 = vpop.permute.xlu0 %614
    %v617 = vadd.f32 %v185, %v615
    %v618 = vtanh.pop %v617
    %v620 = vrot.slane %v618, 1
    %v622 = vsub.f32 %v545, %v620
    %v624 = vrot.slane %v622, 7
    %625 = vrot.lane.b32.xlu0 %v624, 96
    %v626 = vpop.permute.xlu0 %625
    %v628 = vmul.f32 %v605, %v626
    %630 = vrot.lane.b32.xlu0 %v628, 32
    %v631 = vpop.permute.xlu0 %630
    %v633 = vadd.f32 %v618, %v631
    %v634 = vpack.c.bf16 %v633, %v633
    %v636 = vrot.slane %v634, 2
    %637 = vrot.lane.b32.xlu0 %v636, 64
    %v638 = vpop.permute.xlu0 %637
    %v640 = vsel %vm146, %v638, 0
    %642 = vmatprep.subr.bf16.mxu0 0
    %643 = vmatpush1.bf16.msra.mxu0 %v203
    %644 = vmatprep.subr.bf16.mxu0 0
    %645 = vmatpush1.bf16.msra.mxu0 %v204
    %646 = vmatprep.subr.bf16.mxu0 0
    %647 = vmatpush1.bf16.msra.mxu0 0
    %648 = vmatprep.subr.bf16.mxu0 0
    %649 = vmatpush1.bf16.msra.mxu0 0
    %650 = vmatprep.subr.bf16.mxu0 0
    %651 = vmatpush1.bf16.msra.mxu0 0
    %652 = vmatprep.subr.bf16.mxu0 0
    %653 = vmatpush1.bf16.msra.mxu0 0
    %654 = vmatprep.subr.bf16.mxu0 0
    %655 = vmatpush1.bf16.msra.mxu0 0
    %656 = vmatprep.subr.bf16.mxu0 0
    %657 = vmatpush1.bf16.msra.mxu0 0
    %658 = vmatprep.subr.bf16.mxu0 0
    %659 = vmatpush1.bf16.msra.mxu0 0
    %660 = vmatprep.subr.bf16.mxu0 0
    %661 = vmatpush1.bf16.msra.mxu0 0
    %662 = vmatprep.subr.bf16.mxu0 0
    %663 = vmatpush1.bf16.msra.mxu0 0
    %664 = vmatprep.subr.bf16.mxu0 0
    %665 = vmatpush1.bf16.msra.mxu0 0
    %666 = vmatprep.subr.bf16.mxu0 0
    %667 = vmatpush1.bf16.msra.mxu0 0
    %668 = vmatprep.subr.bf16.mxu0 0
    %669 = vmatpush1.bf16.msra.mxu0 0
    %670 = vmatprep.subr.bf16.mxu0 0
    %671 = vmatpush1.bf16.msra.mxu0 0
    %672 = vmatprep.subr.bf16.mxu0 0
    %673 = vmatpush1.bf16.msra.mxu0 0
    %674 = vmatprep.mubr.bf16.mxu0 0
    %675 = vmatmul.mubr.bf16.gmra.mrb[0].mxu0 %v640
    %v676 = vpop.f32.mrb[0].mxu0
    %v677 = vadd.f32 0.0, %v676
    %v678 = vpop.f32.mrb[0].mxu0
    %v679 = vpop.f32.mrb[0].mxu0
    %v680 = vpop.f32.mrb[0].mxu0
    %681 = vdwg.mxu0
    %v683 = vrot.slane %v677, 3
    %v685 = vadd.f32 %v185, %v683
    %v686 = vxor.u32 %v685, 2147483648
    %v687 = vmul.f32 %v686, 1.442695
    %v688 = vpow.pop %v687
    %v689 = vadd.f32 %v688, 1.0
    %v690 = vrcp.pop %v689
    %v691 = vmul.f32 1.0, %v690
    %v692 = vadd.f32 %v677, %v263
    %v694 = vrot.slane %v692, 3
    %695 = vrot.lane.b32.xlu0 %v694, 64
    %v696 = vpop.permute.xlu0 %695
    %v698 = vmul.f32 %v691, %v696
    %700 = vrot.lane.b32.xlu0 %v698, 64
    %v701 = vpop.permute.xlu0 %700
    %v703 = vadd.f32 %v185, %v701
    %v704 = vtanh.pop %v703
    %v706 = vrot.slane %v704, 1
    %v708 = vsub.f32 %v633, %v706
    %v710 = vrot.slane %v708, 7
    %711 = vrot.lane.b32.xlu0 %v710, 96
    %v712 = vpop.permute.xlu0 %711
    %v714 = vmul.f32 %v691, %v712
    %716 = vrot.lane.b32.xlu0 %v714, 32
    %v717 = vpop.permute.xlu0 %716
    %v719 = vadd.f32 %v704, %v717
    %v720 = vpack.c.bf16 %v719, %v719
    %v722 = vshrl.u32 %v720, 16
    %v724 = vrot.slane %v722, 2
    %725 = vrot.lane.b32.xlu0 %v724, 64
    %v726 = vpop.permute.xlu0 %725
    %v728 = vsel %vm146, %v726, 0
    %730 = vmatprep.subr.bf16.mxu0 0
    %731 = vmatpush1.bf16.msra.mxu0 %v203
    %732 = vmatprep.subr.bf16.mxu0 0
    %733 = vmatpush1.bf16.msra.mxu0 %v204
    %734 = vmatprep.subr.bf16.mxu0 0
    %735 = vmatpush1.bf16.msra.mxu0 0
    %736 = vmatprep.subr.bf16.mxu0 0
    %737 = vmatpush1.bf16.msra.mxu0 0
    %738 = vmatprep.subr.bf16.mxu0 0
    %739 = vmatpush1.bf16.msra.mxu0 0
    %740 = vmatprep.subr.bf16.mxu0 0
    %741 = vmatpush1.bf16.msra.mxu0 0
    %742 = vmatprep.subr.bf16.mxu0 0
    %743 = vmatpush1.bf16.msra.mxu0 0
    %744 = vmatprep.subr.bf16.mxu0 0
    %745 = vmatpush1.bf16.msra.mxu0 0
    %746 = vmatprep.subr.bf16.mxu0 0
    %747 = vmatpush1.bf16.msra.mxu0 0
    %748 = vmatprep.subr.bf16.mxu0 0
    %749 = vmatpush1.bf16.msra.mxu0 0
    %750 = vmatprep.subr.bf16.mxu0 0
    %751 = vmatpush1.bf16.msra.mxu0 0
    %752 = vmatprep.subr.bf16.mxu0 0
    %753 = vmatpush1.bf16.msra.mxu0 0
    %754 = vmatprep.subr.bf16.mxu0 0
    %755 = vmatpush1.bf16.msra.mxu0 0
    %756 = vmatprep.subr.bf16.mxu0 0
    %757 = vmatpush1.bf16.msra.mxu0 0
    %758 = vmatprep.subr.bf16.mxu0 0
    %759 = vmatpush1.bf16.msra.mxu0 0
    %760 = vmatprep.subr.bf16.mxu0 0
    %761 = vmatpush1.bf16.msra.mxu0 0
    %762 = vmatprep.mubr.bf16.mxu0 0
    %763 = vmatmul.mubr.bf16.gmra.mrb[0].mxu0 %v728
    %v764 = vpop.f32.mrb[0].mxu0
    %v765 = vadd.f32 0.0, %v764
    %v766 = vpop.f32.mrb[0].mxu0
    %v767 = vpop.f32.mrb[0].mxu0
    %v768 = vpop.f32.mrb[0].mxu0
    %769 = vdwg.mxu0
    %v771 = vrot.slane %v765, 2
    %v773 = vadd.f32 %v185, %v771
    %v774 = vxor.u32 %v773, 2147483648
    %v775 = vmul.f32 %v774, 1.442695
    %v776 = vpow.pop %v775
    %v777 = vadd.f32 %v776, 1.0
    %v778 = vrcp.pop %v777
    %v779 = vmul.f32 1.0, %v778
    %v780 = vadd.f32 %v765, %v263
    %v782 = vrot.slane %v780, 2
    %783 = vrot.lane.b32.xlu0 %v782, 64
    %v784 = vpop.permute.xlu0 %783
    %v786 = vmul.f32 %v779, %v784
    %788 = vrot.lane.b32.xlu0 %v786, 64
    %v789 = vpop.permute.xlu0 %788
    %v791 = vadd.f32 %v185, %v789
    %v792 = vtanh.pop %v791
    %v794 = vrot.slane %v792, 1
    %v796 = vsub.f32 %v719, %v794
    %v798 = vrot.slane %v796, 7
    %799 = vrot.lane.b32.xlu0 %v798, 96
    %v800 = vpop.permute.xlu0 %799
    %v802 = vmul.f32 %v779, %v800
    %804 = vrot.lane.b32.xlu0 %v802, 32
    %v805 = vpop.permute.xlu0 %804
    %v807 = vadd.f32 %v792, %v805
    %v808 = vpack.c.bf16 %v807, %v807
    %v810 = vrot.slane %v808, 3
    %811 = vrot.lane.b32.xlu0 %v810, 64
    %v812 = vpop.permute.xlu0 %811
    %v814 = vsel %vm146, %v812, 0
    %816 = vmatprep.subr.bf16.mxu0 0
    %817 = vmatpush1.bf16.msra.mxu0 %v203
    %818 = vmatprep.subr.bf16.mxu0 0
    %819 = vmatpush1.bf16.msra.mxu0 %v204
    %820 = vmatprep.subr.bf16.mxu0 0
    %821 = vmatpush1.bf16.msra.mxu0 0
    %822 = vmatprep.subr.bf16.mxu0 0
    %823 = vmatpush1.bf16.msra.mxu0 0
    %824 = vmatprep.subr.bf16.mxu0 0
    %825 = vmatpush1.bf16.msra.mxu0 0
    %826 = vmatprep.subr.bf16.mxu0 0
    %827 = vmatpush1.bf16.msra.mxu0 0
    %828 = vmatprep.subr.bf16.mxu0 0
    %829 = vmatpush1.bf16.msra.mxu0 0
    %830 = vmatprep.subr.bf16.mxu0 0
    %831 = vmatpush1.bf16.msra.mxu0 0
    %832 = vmatprep.subr.bf16.mxu0 0
    %833 = vmatpush1.bf16.msra.mxu0 0
    %834 = vmatprep.subr.bf16.mxu0 0
    %835 = vmatpush1.bf16.msra.mxu0 0
    %836 = vmatprep.subr.bf16.mxu0 0
    %837 = vmatpush1.bf16.msra.mxu0 0
    %838 = vmatprep.subr.bf16.mxu0 0
    %839 = vmatpush1.bf16.msra.mxu0 0
    %840 = vmatprep.subr.bf16.mxu0 0
    %841 = vmatpush1.bf16.msra.mxu0 0
    %842 = vmatprep.subr.bf16.mxu0 0
    %843 = vmatpush1.bf16.msra.mxu0 0
    %844 = vmatprep.subr.bf16.mxu0 0
    %845 = vmatpush1.bf16.msra.mxu0 0
    %846 = vmatprep.subr.bf16.mxu0 0
    %847 = vmatpush1.bf16.msra.mxu0 0
    %848 = vmatprep.mubr.bf16.mxu0 0
    %849 = vmatmul.mubr.bf16.gmra.mrb[0].mxu0 %v814
    %v850 = vpop.f32.mrb[0].mxu0
    %v851 = vadd.f32 0.0, %v850
    %v852 = vpop.f32.mrb[0].mxu0
    %v853 = vpop.f32.mrb[0].mxu0
    %v854 = vpop.f32.mrb[0].mxu0
    %855 = vdwg.mxu0
    %v857 = vrot.slane %v851, 1
    %v859 = vadd.f32 %v185, %v857
    %v860 = vxor.u32 %v859, 2147483648
    %v861 = vmul.f32 %v860, 1.442695
    %v862 = vpow.pop %v861
    %v863 = vadd.f32 %v862, 1.0
    %v864 = vrcp.pop %v863
    %v865 = vmul.f32 1.0, %v864
    %v866 = vadd.f32 %v851, %v263
    %v868 = vrot.slane %v866, 1
    %869 = vrot.lane.b32.xlu0 %v868, 64
    %v870 = vpop.permute.xlu0 %869
    %v872 = vmul.f32 %v865, %v870
    %874 = vrot.lane.b32.xlu0 %v872, 64
    %v875 = vpop.permute.xlu0 %874
    %v877 = vadd.f32 %v185, %v875
    %v878 = vtanh.pop %v877
    %v880 = vrot.slane %v878, 1
    %v882 = vsub.f32 %v807, %v880
    %v884 = vrot.slane %v882, 7
    %885 = vrot.lane.b32.xlu0 %v884, 96
    %v886 = vpop.permute.xlu0 %885
    %v888 = vmul.f32 %v865, %v886
    %890 = vrot.lane.b32.xlu0 %v888, 32
    %v891 = vpop.permute.xlu0 %890
    %v893 = vadd.f32 %v878, %v891
    %v894 = vpack.c.bf16 %v893, %v893
    %v895 = vld [vmem:[%s6] sm:$0xf]
    %v896 = vld [vmem:[%s6 + $0x4] sm:$0xf]
    %v897 = vld [vmem:[%s6 + $0x8] sm:$0xf]
    %v898 = vld [vmem:[%s6 + $0xc] sm:$0xf]
    %v899 = vld [vmem:[%s7] sm:$0x1]
    %v901 = vshrl.u32 %v894, 16
    %v903 = vrot.slane %v901, 3
    %904 = vrot.lane.b32.xlu0 %v903, 64
    %v905 = vpop.permute.xlu0 %904
    %v910 = vunpack.c.l.b16 %v895
    %v911 = vunpack.c.l.b16 %v896
    %v912 = vunpack.c.l.b16 %v897
    %v913 = vunpack.c.l.b16 %v898
    %v914 = vpack.c.b16 %v911, %v910
    %v915 = vpack.c.b16 %v913, %v912
    %v919 = vsel %vm146, %v905, 0
    %921 = vmatprep.subr.bf16.mxu0 0
    %922 = vmatpush1.bf16.msra.mxu0 %v914
    %923 = vmatprep.subr.bf16.mxu0 0
    %924 = vmatpush1.bf16.msra.mxu0 %v915
    %925 = vmatprep.subr.bf16.mxu0 0
    %926 = vmatpush1.bf16.msra.mxu0 0
    %927 = vmatprep.subr.bf16.mxu0 0
    %928 = vmatpush1.bf16.msra.mxu0 0
    %929 = vmatprep.subr.bf16.mxu0 0
    %930 = vmatpush1.bf16.msra.mxu0 0
    %931 = vmatprep.subr.bf16.mxu0 0
    %932 = vmatpush1.bf16.msra.mxu0 0
    %933 = vmatprep.subr.bf16.mxu0 0
    %934 = vmatpush1.bf16.msra.mxu0 0
    %935 = vmatprep.subr.bf16.mxu0 0
    %936 = vmatpush1.bf16.msra.mxu0 0
    %937 = vmatprep.subr.bf16.mxu0 0
    %938 = vmatpush1.bf16.msra.mxu0 0
    %939 = vmatprep.subr.bf16.mxu0 0
    %940 = vmatpush1.bf16.msra.mxu0 0
    %941 = vmatprep.subr.bf16.mxu0 0
    %942 = vmatpush1.bf16.msra.mxu0 0
    %943 = vmatprep.subr.bf16.mxu0 0
    %944 = vmatpush1.bf16.msra.mxu0 0
    %945 = vmatprep.subr.bf16.mxu0 0
    %946 = vmatpush1.bf16.msra.mxu0 0
    %947 = vmatprep.subr.bf16.mxu0 0
    %948 = vmatpush1.bf16.msra.mxu0 0
    %949 = vmatprep.subr.bf16.mxu0 0
    %950 = vmatpush1.bf16.msra.mxu0 0
    %951 = vmatprep.subr.bf16.mxu0 0
    %952 = vmatpush1.bf16.msra.mxu0 0
    %953 = vmatprep.mubr.bf16.mxu0 0
    %954 = vmatmul.mubr.bf16.gmra.mrb[0].mxu0 %v919
    %v955 = vpop.f32.mrb[0].mxu0
    %v956 = vadd.f32 %v899, %v955
    %v957 = vpop.f32.mrb[0].mxu0
    %v958 = vpop.f32.mrb[0].mxu0
    %v959 = vpop.f32.mrb[0].mxu0
    %960 = vdwg.mxu0
    %vm961 = vcmask 57344
    %962 = vst.msk [vmem:[#allocation2] sm:$0x1] %vm961, %v956
    // Predicated region
    $region34: #{tpu_custom_call.1} parent=1 // pred_check
      _
    $region35: #{tpu_custom_call.1} parent=1 // pred_check_branch
      %964 = sbr.rel (0) target = $region37
    $region36: #{tpu_custom_call.1} parent=1 // pred_region
      %s966 = ssub.s32 16, 16
      %967 = vsyncadd [#allocation3], %s966
      %s969 = sshll.u32 [#allocation2], 4
      %s970 = int_to_ptr.vmem [resolvable:$true] %s969
      %972 = dma.vmem_to_hbm [thread:$0]  %s970, 16, %s8, [#allocation3]
    $region37: #{tpu_custom_call.1} parent=1 // pred_fallthru
      _
    // Predicated region
    $region38: #{tpu_custom_call.1} parent=1 // pred_check
      _
    $region39: #{tpu_custom_call.1} parent=1 // pred_check_branch
      %974 = sbr.rel (0) target = $region41
    $region40: #{tpu_custom_call.1} parent=1 // pred_region
      %975 = dma.done [#allocation3], 16
    $region41: #{tpu_custom_call.1} parent=1 // pred_fallthru
      _
    %976 = vsyncpa [#allocation3], 1

</llo_original>
